<compile_context>
chip_gen: v7x
topology: tpu7x:2x2x1
jax: 0.10.0
libtpu: 0.0.40
codegen_flags: <defaults>
</compile_context>

<pallas_src>
import jax
import jax.numpy as jnp
from jax.experimental import pallas as pl
from jax.experimental.pallas import tpu as pltpu


MAX_BLOCKDIAG_BYTES = 1 * 1024 * 1024      # cap on each kron(I_tb, W) weight


def _round_up(a: int, m: int) -> int:
    return ((a + m - 1) // m) * m


def _budgets():
    """Generation-aware (target_block_bytes, vmem_limit_bytes)."""
    vmem_phys = None
    try:
        info = pltpu.get_tpu_info()
        for name in ("vmem_capacity_bytes", "vmem_bytes"):
            v = getattr(info, name, None)
            if isinstance(v, int) and v > 0:
                vmem_phys = v
                break
    except Exception:
        vmem_phys = None
    if vmem_phys is not None and vmem_phys >= 96 * 1024 * 1024:
        # v5e / v6e: 128 MiB physical VMEM per TensorCore.
        return 14 * 1024 * 1024, 80 * 1024 * 1024
    # v7x (64 MiB per TensorCore) or unknown generation: stay conservative.
    return 7 * 1024 * 1024, 44 * 1024 * 1024


# ---------------------------------------------------------------------------
# Fused single-pass kernel: pool + FCs + rescale, C-on-sublane, one HBM pass.
# ---------------------------------------------------------------------------
def _se_fused_kernel(x_ref, w1_ref, w2_ref, o_ref):
    # x_ref/o_ref: (1, TB*C, HW) in the input dtype (HW untouched, no padding)
    # w1_ref: (TB*R, TB*C) block-diagonal f32, already scaled by 1/(H*W)
    # w2_ref: (TB*C, TB*R) block-diagonal f32
    x = x_ref[0].astype(jnp.float32)                       # upcast in vregs
    y = jnp.sum(x, axis=-1, keepdims=True)                 # (TB*C, 1) sum-pool
    h = jnp.maximum(
        jnp.dot(w1_ref[...], y, preferred_element_type=jnp.float32), 0.0)
    s = jax.nn.sigmoid(
        jnp.dot(w2_ref[...], h, preferred_element_type=jnp.float32))
    o_ref[0] = (x * s).astype(o_ref.dtype)                 # lane-broadcast gate


def _choose_tb(B, C, R, hw, max_block_bytes):
    """Batch elements folded into the sublane axis per fused grid step."""
    per_batch = C * hw * 4                      # f32 working-set per batch elem
    tb = max(1, min(B, max_block_bytes // max(per_batch, 1)))
    # Block-diagonal excitation weights grow as tb**2 — keep them small.
    while tb > 1 and (tb * C) * (tb * max(R, 1)) * 4 > MAX_BLOCKDIAG_BYTES:
        tb -= 1
    # Target >= min(B, 8) grid steps: feeds both v7x TensorCores and gives the
    # BlockSpec pipeline steps to double-buffer against.
    tb = min(tb, max(1, B // min(B, 8)))
    # tb must divide B (avoid padded batch blocks).
    while B % tb != 0:
        tb -= 1
    return tb


def _se_single_pass(x, w1, w2, max_block_bytes, vmem_limit_bytes, donate):
    # x: (B, C, HW) native dtype; w1: (R, C) f32 already /HW; w2: (C, R) f32
    B, C, hw = x.shape
    R = w1.shape[0]
    tb = _choose_tb(B, C, R, hw, max_block_bytes)
    g = B // tb
    tbc, tbr = tb * C, tb * R

    xg = x.reshape(g, tbc, hw)                  # metadata-only reshape
    eye = jnp.eye(tb, dtype=jnp.float32)
    w1_bd = jnp.kron(eye, w1)                   # (tbr, tbc), block diagonal
    w2_bd = jnp.kron(eye, w2)                   # (tbc, tbr), block diagonal

    alias = {"input_output_aliases": {0: 0}} if donate else {}
    out = pl.pallas_call(
        _se_fused_kernel,
        out_shape=jax.ShapeDtypeStruct((g, tbc, hw), x.dtype),
        grid_spec=pltpu.PrefetchScalarGridSpec(
            num_scalar_prefetch=0,
            grid=(g,),
            in_specs=[
                pl.BlockSpec((1, tbc, hw), lambda i: (i, 0, 0)),
                pl.BlockSpec((tbr, tbc), lambda i: (0, 0)),
                pl.BlockSpec((tbc, tbr), lambda i: (0, 0)),
            ],
            out_specs=pl.BlockSpec((1, tbc, hw), lambda i: (i, 0, 0)),
        ),
        compiler_params=pltpu.CompilerParams(
            dimension_semantics=("parallel",),
            vmem_limit_bytes=vmem_limit_bytes,
        ),
        **alias,
    )(xg, w1_bd, w2_bd)
    return out.reshape(B, C, hw)


# ---------------------------------------------------------------------------
# Phase-fused fallback (one pallas_call) for slabs that exceed the budget:
#   grid (B, 2, n): phase 0 pools spatial chunks (+ gate FCs at the last
#   chunk, kept in VMEM scratch), phase 1 re-reads the chunks and rescales.
# ---------------------------------------------------------------------------
def _make_phase_kernel(hw, th):
    def kernel(x_ref, w1_ref, w2_ref, o_ref, acc_ref, s_ref):
        p = pl.program_id(1)
        j = pl.program_id(2)
        last_j = pl.num_programs(2) - 1

        @pl.when((p == 0) & (j == 0))
        def _init():
            acc_ref[...] = jnp.zeros_like(acc_ref)

        @pl.when(p == 0)
        def _pool():
            xf = x_ref[0].astype(jnp.float32)                    # (C, th)
            lane = jax.lax.broadcasted_iota(jnp.int32, xf.shape, 1)
            valid = lane < (hw - j * th)       # masks the partial tail chunk
            acc_ref[...] += jnp.sum(jnp.where(valid, xf, 0.0),
                                    axis=-1, keepdims=True)

        @pl.when((p == 0) & (j == last_j))
        def _excite():
            h = jnp.maximum(
                jnp.dot(w1_ref[...], acc_ref[...],
                        preferred_element_type=jnp.float32), 0.0)
            s_ref[...] = jax.nn.sigmoid(
                jnp.dot(w2_ref[...], h, preferred_element_type=jnp.float32))

        @pl.when(p == 1)
        def _scale():
            o_ref[0] = (x_ref[0].astype(jnp.float32)
                        * s_ref[...]).astype(o_ref.dtype)

    return kernel


def _se_phase_fused(x, w1, w2, max_block_bytes, vmem_limit_bytes, donate):
    B, C, hw = x.shape
    R = w1.shape[0]
    # Spatial chunk: lane-dense multiple of 128, sized to the block budget and
    # balanced across chunks.  The array is NOT padded: the partial tail chunk
    # (if any) is masked inside the kernel, and partial output stores are
    # masked by Pallas.
    th_max = max(128, (max_block_bytes // (C * 4)) // 128 * 128)
    n = pl.cdiv(hw, th_max)
    th = _round_up(pl.cdiv(hw, n), 128)
    if th >= hw:
        th, n = hw, 1
    else:
        n = pl.cdiv(hw, th)

    alias = {"input_output_aliases": {0: 0}} if donate else {}
    out = pl.pallas_call(
        _make_phase_kernel(hw, th),
        out_shape=jax.ShapeDtypeStruct((B, C, hw), x.dtype),
        grid_spec=pltpu.PrefetchScalarGridSpec(
            num_scalar_prefetch=0,
            grid=(B, 2, n),
            in_specs=[
                pl.BlockSpec((1, C, th), lambda b, p, j: (b, 0, j)),
                pl.BlockSpec((R, C), lambda b, p, j: (0, 0)),
                pl.BlockSpec((C, R), lambda b, p, j: (0, 0)),
            ],
            # Phase 0 parks the output window on block 0 (no write-back while
            # pooling); phase 1 walks the spatial blocks and writes each tile
            # exactly once.
            out_specs=pl.BlockSpec((1, C, th), lambda b, p, j: (b, 0, p * j)),
            scratch_shapes=[pltpu.VMEM((C, 1), jnp.float32),    # pooled sum
                            pltpu.VMEM((C, 1), jnp.float32)],   # sigmoid gate
        ),
        compiler_params=pltpu.CompilerParams(
            dimension_semantics=("parallel", "arbitrary", "arbitrary"),
            vmem_limit_bytes=vmem_limit_bytes,
        ),
        **alias,
    )(x, w1, w2)
    return out


# ---------------------------------------------------------------------------
# Public wrapper
# ---------------------------------------------------------------------------
def se_block(x_nchw, w1, w2, *, max_block_bytes=None, vmem_limit_bytes=None,
             donate=False):
    """SEBlock forward.

    x_nchw: (B, C, H, W) in its native dtype (f32 or bf16).
    w1: PyTorch Linear weight (C//r, C)  (out, in), bias-free.
    w2: PyTorch Linear weight (C, C//r)  (out, in), bias-free.
    donate: set True only when the caller donates x (jit donate_argnums) —
            enables input_output_aliases on the kernel's x buffer.
    """
    B, C, H, W = x_nchw.shape
    hw = H * W
    tgt, lim = _budgets()
    if max_block_bytes is None:
        max_block_bytes = tgt
    if vmem_limit_bytes is None:
        vmem_limit_bytes = lim

    x = x_nchw.reshape(B, C, hw)                    # metadata-only reshape
    w1f = jnp.asarray(w1, jnp.float32) / float(hw)  # fold mean's 1/(H*W) into W1
    w2f = jnp.asarray(w2, jnp.float32)

    if C * hw * 4 <= max_block_bytes:               # f32 working-set per batch
        out = _se_single_pass(x, w1f, w2f, max_block_bytes,
                              vmem_limit_bytes, donate)
    else:
        out = _se_phase_fused(x, w1f, w2f, max_block_bytes,
                              vmem_limit_bytes, donate)
    return out.reshape(B, C, H, W)


def se_block_ref(x_nchw, w1, w2):
    """Pure-JAX reference matching the PyTorch module semantics."""
    y = jnp.mean(x_nchw, axis=(2, 3))              # AdaptiveAvgPool2d(1)
    y = jnp.maximum(y @ w1.T, 0.0)                 # Linear (no bias) + ReLU
    y = jax.nn.sigmoid(y @ w2.T)                   # Linear (no bias) + Sigmoid
    return x_nchw * y[:, :, None, None]


if __name__ == "__main__":
    # Module config: channels=32, reduction=16 -> hidden = 2
    B, C, reduction = 2, 32, 16
    R = C // reduction

    key = jax.random.PRNGKey(0)
    kx, k1, k2, kr = jax.random.split(key, 4)
    w1 = 0.1 * jax.random.normal(k1, (R, C), dtype=jnp.float32)   # (out, in)
    w2 = 0.1 * jax.random.normal(k2, (C, R), dtype=jnp.float32)   # (out, in)

    def check(x, out, atol=1e-4, rtol=1e-4, name=""):
        ref = se_block_ref(x.astype(jnp.float32), w1, w2)
        assert jnp.allclose(out.astype(jnp.float32), ref,
                            atol=atol, rtol=rtol), f"mismatch: {name}"

    # 1) fused single-pass, f32, lane-aligned spatial (16x16)
    x16 = jax.random.normal(kx, (B, C, 16, 16), dtype=jnp.float32)
    out = jax.block_until_ready(se_block(x16, w1, w2))
    assert out.shape == x16.shape and out.dtype == x16.dtype
    check(x16, out, name="fused f32 16x16")

    # 2) fused single-pass, ragged spatial (7x7 -> H*W = 49, masked lane tail)
    x7 = jax.random.normal(kr, (B, C, 7, 7), dtype=jnp.float32)
    out = jax.block_until_ready(se_block(x7, w1, w2))
    check(x7, out, name="fused f32 7x7")

    # 3) fused single-pass, native bf16 I/O (f32 math in vregs)
    xb = x16.astype(jnp.bfloat16)
    out = jax.block_until_ready(se_block(xb, w1, w2))
    assert out.dtype == jnp.bfloat16
    check(xb, out, atol=3e-2, rtol=3e-2, name="fused bf16 16x16")

    # 4) phase-fused fallback (forced tiny budget), evenly divided chunks
    out = jax.block_until_ready(se_block(x16, w1, w2, max_block_bytes=16 * 1024))
    check(x16, out, name="fallback f32 16x16")

    # 5) phase-fused fallback with a partial (masked) tail chunk (12x12 -> 144)
    x12 = jax.random.normal(jax.random.PRNGKey(3), (B, C, 12, 12),
                            dtype=jnp.float32)
    out = jax.block_until_ready(se_block(x12, w1, w2, max_block_bytes=16 * 1024))
    check(x12, out, name="fallback f32 ragged tail")

    # 6) aliased (donated) fused path under jit
    xd = jax.random.normal(jax.random.PRNGKey(7), (B, C, 16, 16),
                           dtype=jnp.float32)
    refd = se_block_ref(xd, w1, w2)
    f = jax.jit(lambda xx: se_block(xx, w1, w2, donate=True), donate_argnums=0)
    outd = jax.block_until_ready(f(xd))
    assert jnp.allclose(outd, refd, atol=1e-4, rtol=1e-4), "mismatch: donated"

    print("KERNEL_OK")
</pallas_src>

<mosaic_0001>
module attributes {stable_mosaic.version = 11 : i64} {
  func.func @_se_fused_kernel(%arg0: i32, %arg1: memref<1x32x256xf32, #tpu.memory_space<vmem>>, %arg2: memref<2x32xf32, #tpu.memory_space<vmem>>, %arg3: memref<32x2xf32, #tpu.memory_space<vmem>>, %arg4: memref<1x32x256xf32, #tpu.memory_space<vmem>>) attributes {dimension_semantics = [#tpu.dimension_semantics<parallel>], iteration_bounds = array<i64: 2>, scalar_prefetch = 0 : i64, scratch_operands = 0 : i64, tpu.core_type = #tpu.core_type<tc>, window_params = [{transform_indices = @transform_0, window_bounds = array<i64: 1, 32, 256>}, {pipeline_mode = #tpu.pipeline_mode<synchronous>, transform_indices = @transform_1, window_bounds = array<i64: 2, 32>}, {pipeline_mode = #tpu.pipeline_mode<synchronous>, transform_indices = @transform_2, window_bounds = array<i64: 32, 2>}, {transform_indices = @transform_3, window_bounds = array<i64: 1, 32, 256>}]} {
    %c0 = arith.constant 0 : index
    %c0_0 = arith.constant 0 : index
    %c0_1 = arith.constant 0 : index
    %0 = vector.load %arg1[%c0, %c0_0, %c0_1] : memref<1x32x256xf32, #tpu.memory_space<vmem>>, vector<1x32x256xf32>
    %1 = vector.shape_cast %0 : vector<1x32x256xf32> to vector<32x256xf32>
    %cst = arith.constant dense<0.000000e+00> : vector<32xf32>
    %2 = vector.multi_reduction <add>, %1, %cst [1] : vector<32x256xf32> to vector<32xf32>
    %3 = vector.shape_cast %2 : vector<32xf32> to vector<32x1xf32>
    %c0_2 = arith.constant 0 : index
    %c0_3 = arith.constant 0 : index
    %4 = vector.load %arg2[%c0_2, %c0_3] : memref<2x32xf32, #tpu.memory_space<vmem>>, vector<2x32xf32>
    %cst_4 = arith.constant dense<0.000000e+00> : vector<2x1xf32>
    %5 = tpu.matmul %4, %3, %cst_4 {dimension_numbers = #tpu.dot_dimension_numbers<[1], [0], [0], [1], [0, 0, 1, 1], [], []>} : vector<2x32xf32>, vector<32x1xf32>, vector<2x1xf32> -> vector<2x1xf32>
    %cst_5 = arith.constant 0.000000e+00 : f32
    %6 = vector.broadcast %cst_5 : f32 to vector<2x1xf32>
    %7 = arith.maximumf %5, %6 : vector<2x1xf32>
    %c0_6 = arith.constant 0 : index
    %c0_7 = arith.constant 0 : index
    %8 = vector.load %arg3[%c0_6, %c0_7] : memref<32x2xf32, #tpu.memory_space<vmem>>, vector<32x2xf32>
    %cst_8 = arith.constant dense<0.000000e+00> : vector<32x1xf32>
    %9 = tpu.matmul %8, %7, %cst_8 {dimension_numbers = #tpu.dot_dimension_numbers<[1], [0], [0], [1], [0, 0, 1, 1], [], []>} : vector<32x2xf32>, vector<2x1xf32>, vector<32x1xf32> -> vector<32x1xf32>
    %10 = arith.negf %9 : vector<32x1xf32>
    %11 = math.exp %10 : vector<32x1xf32>
    %cst_9 = arith.constant 1.000000e+00 : f32
    %12 = vector.broadcast %cst_9 : f32 to vector<32x1xf32>
    %13 = arith.addf %12, %11 : vector<32x1xf32>
    %14 = arith.divf %12, %13 : vector<32x1xf32>
    %15 = vector.broadcast %14 : vector<32x1xf32> to vector<32x256xf32>
    %16 = arith.mulf %1, %15 : vector<32x256xf32>
    %c0_10 = arith.constant 0 : index
    %c0_11 = arith.constant 0 : index
    %c0_12 = arith.constant 0 : index
    %17 = vector.load %arg4[%c0_10, %c0_11, %c0_12] : memref<1x32x256xf32, #tpu.memory_space<vmem>>, vector<1x32x256xf32>
    %18 = vector.shape_cast %17 : vector<1x32x256xf32> to vector<32x256xf32>
    %19 = vector.shape_cast %16 : vector<32x256xf32> to vector<1x32x256xf32>
    tpu.vector_store %arg4[%c0_10, %c0_11, %c0_12], %19 {strides = array<i32>} : memref<1x32x256xf32, #tpu.memory_space<vmem>>, vector<1x32x256xf32>,
    return
  }
  func.func @transform_0(%arg0: i32) -> (i32, i32, i32) {
    %c0_i32 = arith.constant 0 : i32
    %c0_i32_0 = arith.constant 0 : i32
    %c0_i32_1 = arith.constant 0 : i32
    return %arg0, %c0_i32, %c0_i32_0 : i32, i32, i32
  }
  func.func @transform_1(%arg0: i32) -> (i32, i32) {
    %c0_i32 = arith.constant 0 : i32
    %c0_i32_0 = arith.constant 0 : i32
    %c0_i32_1 = arith.constant 0 : i32
    return %c0_i32, %c0_i32_0 : i32, i32
  }
  func.func @transform_2(%arg0: i32) -> (i32, i32) {
    %c0_i32 = arith.constant 0 : i32
    %c0_i32_0 = arith.constant 0 : i32
    %c0_i32_1 = arith.constant 0 : i32
    return %c0_i32, %c0_i32_0 : i32, i32
  }
  func.func @transform_3(%arg0: i32) -> (i32, i32, i32) {
    %c0_i32 = arith.constant 0 : i32
    %c0_i32_0 = arith.constant 0 : i32
    %c0_i32_1 = arith.constant 0 : i32
    return %arg0, %c0_i32, %c0_i32_0 : i32, i32, i32
  }
}

</mosaic_0001>

<llo_original>
// kernel: tpu_custom_call.1
$region0: #{tpu_custom_call.1}
  #allocation0 [shape = 'u32[]', space=smem, size = 0x4, offset = 0x4, fixed_abs, tag = 'smem constant byte address 0x4 - core index']
  #allocation1 [shape = 'u32[144,128]{1,0:T(1,128)}', space=vmem, size = 0x12000, scoped, tag = 'internal scratch']
  %s0 = inlined_call_operand.hbm [shape: f32[2,32,256], index: 0, kind: input, shape index: {}]
  %s1 = inlined_call_operand.vmem [shape: f32[2,32], index: 1, kind: input, shape index: {}]
  %s2 = inlined_call_operand.vmem [shape: f32[32,2], index: 2, kind: input, shape index: {}]
  %s3 = inlined_call_operand.hbm [shape: f32[2,32,256], index: 3, kind: output, shape index: {}]
  %s4 = sld [smem:[#allocation0]]
  $region49: #{tpu_custom_call.1} parent=0
    _
  %s6 = ssub.s32 1, %s4
  %s7 = scalar_select 0, %s6, %s4
  $region1: #{tpu_custom_call.1} parent=0
    #allocation2 [shape = 'u8[65536]{0}', space=vmem, size = 0x10000, scoped, tag = 'input window, operand 0']
    #allocation3 [shape = 's32[2]{0}', space=sflag, size = 0x8, scoped, tag = 'scoped memory for tpu_custom_call.1']
    #allocation4 [shape = 's32[2]{0}', space=sflag, size = 0x8, scoped, tag = 'scoped memory for tpu_custom_call.1']
    #allocation5 [shape = 'u8[65536]{0}', space=vmem, size = 0x10000, scoped, tag = 'output window, operand 0']
    %8 = vsyncpa [#allocation3], 0
    %s9 = scalar_lea.sflag [#allocation3], 1
    %10 = vsyncpa %s9, 0
    %11 = vsyncpa [#allocation4], 0
    %s12 = scalar_lea.sflag [#allocation4], 1
    %13 = vsyncpa %s12, 0
    loop: start=0, step=1, limit=4
    $region2: #{tpu_custom_call.1} parent=1 // loop_pre_header
      _
    $region3: #{tpu_custom_call.1} parent=1 // loop_header
      %s15 = sphi 0, %s19
      %p16 = scmp.ge.s32.totalorder %s15, 4
      %s25 = sphi 0, %s27
      %s28 = sphi 0, %s25
      %s29 = sphi 0, %s28
      %s45 = sphi 0, %s29
      %s49 = sphi 0, %s49
      %s51 = sphi 0, %s49
      %s52 = sphi 0, %s51
      %s66 = sphi 0, %s52
      %s70 = sphi 0, %s70
      %s72 = sphi 0, %s70
      %s73 = sphi 0, %s72
      %s87 = sphi 0, %s73
      %s93 = sphi 0, %s95
      %s96 = sphi 0, %s93
      %s97 = sphi 0, %s96
      %s113 = sphi 0, %s97
    $region4: #{tpu_custom_call.1} parent=1 // loop_header_branch
      %18 = sbr.rel (%p16) target = $region8
    $region5: #{tpu_custom_call.1} parent=1 // loop_body
      %s20 = ssub.s32 %s15, 1
      %s21 = ssub.s32 %s15, 2
      %s22 = sadd.s32 %s15, 1
      %s23 = ssub.s32 %s15, %s22
      %p24 = scmp.eq.s32.totalorder %s23, 0
      %s26 = sadd.s32 %s25, 1
      %s27 = scalar_select %p24, %s25, %s26
      %p30 = pneg %p24
      %p31 = scmp.eq.s32.totalorder %s15, 1
      %p32 = por %p30, %p31
      %p33 = scmp.ne.s32.totalorder %s25, %s28
      %p34 = scmp.eq.s32.totalorder %s15, 0
      %p35 = por %p33, %p34
      %p36 = scmp.ne.s32.totalorder %s25, %s28
      %p37 = scmp.eq.s32.totalorder %s20, 1
      %p38 = por %p36, %p37
      %p39 = scmp.ne.s32.totalorder %s28, %s29
      %p40 = scmp.eq.s32.totalorder %s20, 0
      %p41 = por %p39, %p40
      %p42 = scmp.ne.s32.totalorder %s28, %s29
      %p43 = scmp.eq.s32.totalorder %s21, 1
      %p44 = por %p42, %p43
      %p46 = scmp.ne.s32.totalorder %s29, %s45
      %p47 = scmp.eq.s32.totalorder %s21, 0
      %p48 = por %p46, %p47
      %s50 = sadd.s32 %s49, 1
      %p53 = scmp.eq.s32.totalorder %s15, 1
      %p54 = scmp.ne.s32.totalorder %s49, %s51
      %p55 = scmp.eq.s32.totalorder %s15, 0
      %p56 = por %p54, %p55
      %p57 = scmp.ne.s32.totalorder %s49, %s51
      %p58 = scmp.eq.s32.totalorder %s20, 1
      %p59 = por %p57, %p58
      %p60 = scmp.ne.s32.totalorder %s51, %s52
      %p61 = scmp.eq.s32.totalorder %s20, 0
      %p62 = por %p60, %p61
      %p63 = scmp.ne.s32.totalorder %s51, %s52
      %p64 = scmp.eq.s32.totalorder %s21, 1
      %p65 = por %p63, %p64
      %p67 = scmp.ne.s32.totalorder %s52, %s66
      %p68 = scmp.eq.s32.totalorder %s21, 0
      %p69 = por %p67, %p68
      %s71 = sadd.s32 %s70, 1
      %p74 = scmp.eq.s32.totalorder %s15, 1
      %p75 = scmp.ne.s32.totalorder %s70, %s72
      %p76 = scmp.eq.s32.totalorder %s15, 0
      %p77 = por %p75, %p76
      %p78 = scmp.ne.s32.totalorder %s70, %s72
      %p79 = scmp.eq.s32.totalorder %s20, 1
      %p80 = por %p78, %p79
      %p81 = scmp.ne.s32.totalorder %s72, %s73
      %p82 = scmp.eq.s32.totalorder %s20, 0
      %p83 = por %p81, %p82
      %p84 = scmp.ne.s32.totalorder %s72, %s73
      %p85 = scmp.eq.s32.totalorder %s21, 1
      %p86 = por %p84, %p85
      %p88 = scmp.ne.s32.totalorder %s73, %s87
      %p89 = scmp.eq.s32.totalorder %s21, 0
      %p90 = por %p88, %p89
      %s91 = ssub.s32 %s15, %s22
      %p92 = scmp.eq.s32.totalorder %s91, 0
      %s94 = sadd.s32 %s93, 1
      %s95 = scalar_select %p92, %s93, %s94
      %p98 = pneg %p92
      %p99 = scmp.eq.s32.totalorder %s15, 1
      %p100 = por %p98, %p99
      %p101 = scmp.ne.s32.totalorder %s93, %s96
      %p102 = scmp.eq.s32.totalorder %s15, 0
      %p103 = por %p101, %p102
      %p104 = scmp.ne.s32.totalorder %s93, %s96
      %p105 = scmp.eq.s32.totalorder %s20, 1
      %p106 = por %p104, %p105
      %p107 = scmp.ne.s32.totalorder %s96, %s97
      %p108 = scmp.eq.s32.totalorder %s20, 0
      %p109 = por %p107, %p108
      %p110 = scmp.ne.s32.totalorder %s96, %s97
      %p111 = scmp.eq.s32.totalorder %s21, 1
      %p112 = por %p110, %p111
      %p114 = scmp.ne.s32.totalorder %s97, %s113
      %p115 = scmp.eq.s32.totalorder %s21, 0
      %p116 = por %p114, %p115
      %p117 = scmp.le.s32.totalorder 1, %s15
      %p118 = scmp.lt.s32.totalorder %s15, 3
      %p119 = pnand %p117, %p118
      %p120 = pneg %p119
      // Predicated region
      $region9: #{tpu_custom_call.1} parent=5 // pred_check
        _
      $region10: #{tpu_custom_call.1} parent=5 // pred_check_branch
        %122 = sbr.rel (%p119) target = $region12
      $region11: #{tpu_custom_call.1} parent=5 // pred_region
        %s123 = ssub.s32 %s15, 1
        // Predicated region
        $region13: #{tpu_custom_call.1} parent=11 // pred_check
          %p124 = pneg %p62
        $region14: #{tpu_custom_call.1} parent=11 // pred_check_branch
          %126 = sbr.rel (%p124) target = $region16
        $region15: #{tpu_custom_call.1} parent=11 // pred_region
          _
        $region16: #{tpu_custom_call.1} parent=11 // pred_fallthru
          _
        // Predicated region
        $region17: #{tpu_custom_call.1} parent=11 // pred_check
          %p127 = pneg %p83
        $region18: #{tpu_custom_call.1} parent=11 // pred_check_branch
          %129 = sbr.rel (%p127) target = $region20
        $region19: #{tpu_custom_call.1} parent=11 // pred_region
          _
        $region20: #{tpu_custom_call.1} parent=11 // pred_fallthru
          _
      $region12: #{tpu_custom_call.1} parent=5 // pred_fallthru
        _
      %p130 = scmp.lt.s32.totalorder %s15, 2
      // Predicated region
      $region21: #{tpu_custom_call.1} parent=5 // pred_check
        %p131 = pneg %p130
      $region22: #{tpu_custom_call.1} parent=5 // pred_check_branch
        %133 = sbr.rel (%p131) target = $region24
      $region23: #{tpu_custom_call.1} parent=5 // pred_region
        // Predicated region
        $region25: #{tpu_custom_call.1} parent=23 // pred_check
          %p134 = pneg %p35
        $region26: #{tpu_custom_call.1} parent=23 // pred_check_branch
          %136 = sbr.rel (%p134) target = $region28
        $region27: #{tpu_custom_call.1} parent=23 // pred_region
          %s137 = sand.u32 %s25, 1
          %s138 = scalar_lea.sflag [#allocation3], %s137
          %s139 = sand.u32 %s25, 1
          %s140 = smul.addr %s139, 64
          %s141 = scalar_lea.vmem [#allocation2], %s140
          %s143 = ssub.s32 1024, 1024
          %144 = vsyncadd %s138, %s143
          %s145 = smul.addr %s15, 8
          %s146 = smul.addr %s145, 128
          %s147 = scalar_lea.hbm %s0, %s146
          %s148 = sshll.u32 %s141, 4
          %s149 = int_to_ptr.vmem [resolvable:$true] %s148
          %154 = dma.hbm_to_vmem [thread:$0]  %s147, 1024, %s149, %s138, 256, 256, 16
        $region28: #{tpu_custom_call.1} parent=23 // pred_fallthru
          _
      $region24: #{tpu_custom_call.1} parent=5 // pred_fallthru
        _
      %p155 = scmp.le.s32.totalorder 1, %s15
      %p156 = scmp.lt.s32.totalorder %s15, 3
      %p157 = pnand %p155, %p156
      %p158 = pneg %p157
      // Predicated region
      $region29: #{tpu_custom_call.1} parent=5 // pred_check
        _
      $region30: #{tpu_custom_call.1} parent=5 // pred_check_branch
        %160 = sbr.rel (%p157) target = $region32
      $region31: #{tpu_custom_call.1} parent=5 // pred_region
        %s161 = ssub.s32 %s15, 1
        %s162 = sand.u32 %s28, 1
        %s163 = scalar_lea.sflag [#allocation3], %s162
        %s164 = sand.u32 %s28, 1
        %s165 = smul.addr %s164, 64
        %s166 = scalar_lea.vmem [#allocation2], %s165
        // Predicated region
        $region33: #{tpu_custom_call.1} parent=31 // pred_check
          %p167 = pneg %p41
        $region34: #{tpu_custom_call.1} parent=31 // pred_check_branch
          %169 = sbr.rel (%p167) target = $region36
        $region35: #{tpu_custom_call.1} parent=31 // pred_region
          %170 = dma.done %s163, 1024
        $region36: #{tpu_custom_call.1} parent=31 // pred_fallthru
          _
        %s171 = sand.u32 %s28, 1
        %s172 = scalar_lea.sflag [#allocation3], %s171
        %s173 = sand.u32 %s28, 1
        %s174 = smul.addr %s173, 64
        %s175 = scalar_lea.vmem [#allocation2], %s174
        %p176 = pneg %p41
        %p177 = pneg %p38
        %p178 = pneg %p62
        %p179 = pneg %p59
        %p180 = pneg %p83
        %p181 = pneg %p80
        %p182 = pneg %p109
        %p183 = pneg %p106
        %s184 = sand.u32 %s96, 1
        %s185 = scalar_lea.sflag [#allocation4], %s184
        %s186 = sand.u32 %s96, 1
        %s187 = smul.addr %s186, 64
        %s188 = scalar_lea.vmem [#allocation5], %s187
        %v189 = vld [vmem:[%s166] sm:$0xff]
        %v190 = vld [vmem:[%s166 + $0x8] sm:$0xff]
        %v191 = vld [vmem:[%s166 + $0x10] sm:$0xff]
        %v192 = vld [vmem:[%s166 + $0x18] sm:$0xff]
        %v193 = vld [vmem:[%s166 + $0x20] sm:$0xff]
        %v194 = vld [vmem:[%s166 + $0x28] sm:$0xff]
        %v195 = vld [vmem:[%s166 + $0x30] sm:$0xff]
        %v196 = vld [vmem:[%s166 + $0x38] sm:$0xff]
        %v197 = vadd.f32 %v189, %v190
        %198 = vadd.xlane.f32.xlu0 %v197
        %v199 = vpop.xlane.xlu0 %198
        %v200 = vadd.f32 %v191, %v192
        %201 = vadd.xlane.f32.xlu0 %v200
        %v202 = vpop.xlane.xlu0 %201
        %v203 = vadd.f32 %v193, %v194
        %204 = vadd.xlane.f32.xlu0 %v203
        %v205 = vpop.xlane.xlu0 %204
        %v206 = vadd.f32 %v195, %v196
        %207 = vadd.xlane.f32.xlu0 %v206
        %v208 = vpop.xlane.xlu0 %207
        %v209 = vld [vmem:[%s1] sm:$0x3]
        %vm210 = vcmask 261120
        %v212 = vsel %vm210, %v209, 0
        %214 = vmatprep.subr.mxu0 0.0
        %215 = vmatpush1.msra.mxu0 %v199
        %216 = vmatprep.subr.mxu0 0.0
        %217 = vmatpush1.msra.mxu0 %v202
        %218 = vmatprep.subr.mxu0 0.0
        %219 = vmatpush1.msra.mxu0 %v205
        %220 = vmatprep.subr.mxu0 0.0
        %221 = vmatpush1.msra.mxu0 %v208
        %222 = vmatprep.subr.mxu0 0.0
        %223 = vmatpush1.msra.mxu0 0.0
        %224 = vmatprep.subr.mxu0 0.0
        %225 = vmatpush1.msra.mxu0 0.0
        %226 = vmatprep.subr.mxu0 0.0
        %227 = vmatpush1.msra.mxu0 0.0
        %228 = vmatprep.subr.mxu0 0.0
        %229 = vmatpush1.msra.mxu0 0.0
        %230 = vmatprep.subr.mxu0 0.0
        %231 = vmatpush1.msra.mxu0 0.0
        %232 = vmatprep.subr.mxu0 0.0
        %233 = vmatpush1.msra.mxu0 0.0
        %234 = vmatprep.subr.mxu0 0.0
        %235 = vmatpush1.msra.mxu0 0.0
        %236 = vmatprep.subr.mxu0 0.0
        %237 = vmatpush1.msra.mxu0 0.0
        %238 = vmatprep.subr.mxu0 0.0
        %239 = vmatpush1.msra.mxu0 0.0
        %240 = vmatprep.subr.mxu0 0.0
        %241 = vmatpush1.msra.mxu0 0.0
        %242 = vmatprep.subr.mxu0 0.0
        %243 = vmatpush1.msra.mxu0 0.0
        %244 = vmatprep.subr.mxu0 0.0
        %245 = vmatpush1.msra.mxu0 0.0
        %246 = vmatprep.subr.mxu0 0.0
        %247 = vmatpush1.msra.mxu0 0.0
        %248 = vmatprep.subr.mxu0 0.0
        %249 = vmatpush1.msra.mxu0 0.0
        %250 = vmatprep.subr.mxu0 0.0
        %251 = vmatpush1.msra.mxu0 0.0
        %252 = vmatprep.subr.mxu0 0.0
        %253 = vmatpush1.msra.mxu0 0.0
        %254 = vmatprep.subr.mxu0 0.0
        %255 = vmatpush1.msra.mxu0 0.0
        %256 = vmatprep.subr.mxu0 0.0
        %257 = vmatpush1.msra.mxu0 0.0
        %258 = vmatprep.subr.mxu0 0.0
        %259 = vmatpush1.msra.mxu0 0.0
        %260 = vmatprep.subr.mxu0 0.0
        %261 = vmatpush1.msra.mxu0 0.0
        %262 = vmatprep.subr.mxu0 0.0
        %263 = vmatpush1.msra.mxu0 0.0
        %264 = vmatprep.subr.mxu0 0.0
        %265 = vmatpush1.msra.mxu0 0.0
        %266 = vmatprep.subr.mxu0 0.0
        %267 = vmatpush1.msra.mxu0 0.0
        %268 = vmatprep.subr.mxu0 0.0
        %269 = vmatpush1.msra.mxu0 0.0
        %270 = vmatprep.subr.mxu0 0.0
        %271 = vmatpush1.msra.mxu0 0.0
        %272 = vmatprep.subr.mxu0 0.0
        %273 = vmatpush1.msra.mxu0 0.0
        %274 = vmatprep.subr.mxu0 0.0
        %275 = vmatpush1.msra.mxu0 0.0
        %276 = vmatprep.subr.mxu0 0.0
        %277 = vmatpush1.msra.mxu0 0.0
        %278 = vmatprep.mubr.f32.mxu0 0.0
        %279 = vmatmul.mubr.f32.gmra.mrb[0].mxu0 %v212
        %v280 = vpop.f32.mrb[0].mxu0
        %v281 = vadd.f32 0.0, %v280
        %v282 = vpop.f32.mrb[0].mxu0
        %283 = vdwg.mxu0
        %v284 = vmax.f32 %v281, 0.0
        %v285 = vld [vmem:[%s2] sm:$0xff]
        %v286 = vld [vmem:[%s2 + $0x8] sm:$0xff]
        %v287 = vld [vmem:[%s2 + $0x10] sm:$0xff]
        %v288 = vld [vmem:[%s2 + $0x18] sm:$0xff]
        %vm289 = vcmask 15360
        %v291 = vsel %vm289, %v285, 0
        %v294 = vsel %vm289, %v286, 0
        %v297 = vsel %vm289, %v287, 0
        %v300 = vsel %vm289, %v288, 0
        %vm302 = vcmask 1041408
        %v304 = vsel %vm302, %v284, 0
        %306 = vmatprep.subr.mxu0 0.0
        %307 = vmatpush1.msra.mxu0 %v304
        %308 = vmatprep.subr.mxu0 0.0
        %309 = vmatpush1.msra.mxu0 0.0
        %310 = vmatprep.subr.mxu0 0.0
        %311 = vmatpush1.msra.mxu0 0.0
        %312 = vmatprep.subr.mxu0 0.0
        %313 = vmatpush1.msra.mxu0 0.0
        %314 = vmatprep.subr.mxu0 0.0
        %315 = vmatpush1.msra.mxu0 0.0
        %316 = vmatprep.subr.mxu0 0.0
        %317 = vmatpush1.msra.mxu0 0.0
        %318 = vmatprep.subr.mxu0 0.0
        %319 = vmatpush1.msra.mxu0 0.0
        %320 = vmatprep.subr.mxu0 0.0
        %321 = vmatpush1.msra.mxu0 0.0
        %322 = vmatprep.subr.mxu0 0.0
        %323 = vmatpush1.msra.mxu0 0.0
        %324 = vmatprep.subr.mxu0 0.0
        %325 = vmatpush1.msra.mxu0 0.0
        %326 = vmatprep.subr.mxu0 0.0
        %327 = vmatpush1.msra.mxu0 0.0
        %328 = vmatprep.subr.mxu0 0.0
        %329 = vmatpush1.msra.mxu0 0.0
        %330 = vmatprep.subr.mxu0 0.0
        %331 = vmatpush1.msra.mxu0 0.0
        %332 = vmatprep.subr.mxu0 0.0
        %333 = vmatpush1.msra.mxu0 0.0
        %334 = vmatprep.subr.mxu0 0.0
        %335 = vmatpush1.msra.mxu0 0.0
        %336 = vmatprep.subr.mxu0 0.0
        %337 = vmatpush1.msra.mxu0 0.0
        %338 = vmatprep.subr.mxu0 0.0
        %339 = vmatpush1.msra.mxu0 0.0
        %340 = vmatprep.subr.mxu0 0.0
        %341 = vmatpush1.msra.mxu0 0.0
        %342 = vmatprep.subr.mxu0 0.0
        %343 = vmatpush1.msra.mxu0 0.0
        %344 = vmatprep.subr.mxu0 0.0
        %345 = vmatpush1.msra.mxu0 0.0
        %346 = vmatprep.subr.mxu0 0.0
        %347 = vmatpush1.msra.mxu0 0.0
        %348 = vmatprep.subr.mxu0 0.0
        %349 = vmatpush1.msra.mxu0 0.0
        %350 = vmatprep.subr.mxu0 0.0
        %351 = vmatpush1.msra.mxu0 0.0
        %352 = vmatprep.subr.mxu0 0.0
        %353 = vmatpush1.msra.mxu0 0.0
        %354 = vmatprep.subr.mxu0 0.0
        %355 = vmatpush1.msra.mxu0 0.0
        %356 = vmatprep.subr.mxu0 0.0
        %357 = vmatpush1.msra.mxu0 0.0
        %358 = vmatprep.subr.mxu0 0.0
        %359 = vmatpush1.msra.mxu0 0.0
        %360 = vmatprep.subr.mxu0 0.0
        %361 = vmatpush1.msra.mxu0 0.0
        %362 = vmatprep.subr.mxu0 0.0
        %363 = vmatpush1.msra.mxu0 0.0
        %364 = vmatprep.subr.mxu0 0.0
        %365 = vmatpush1.msra.mxu0 0.0
        %366 = vmatprep.subr.mxu0 0.0
        %367 = vmatpush1.msra.mxu0 0.0
        %368 = vmatprep.subr.mxu0 0.0
        %369 = vmatpush1.msra.mxu0 0.0
        %370 = vmatprep.mubr.f32.mxu0 0.0
        %371 = vmatmul.mubr.f32.gmra.mrb[0].mxu0 %v291
        %v372 = vpop.f32.mrb[0].mxu0
        %v373 = vadd.f32 0.0, %v372
        %v374 = vpop.f32.mrb[0].mxu0
        %375 = vmatprep.mubr.f32.mxu0 0.0
        %376 = vmatmul.mubr.f32.gmra.mrb[0].mxu0 %v294
        %v377 = vpop.f32.mrb[0].mxu0
        %v378 = vadd.f32 0.0, %v377
        %v379 = vpop.f32.mrb[0].mxu0
        %380 = vmatprep.mubr.f32.mxu0 0.0
        %381 = vmatmul.mubr.f32.gmra.mrb[0].mxu0 %v297
        %v382 = vpop.f32.mrb[0].mxu0
        %v383 = vadd.f32 0.0, %v382
        %v384 = vpop.f32.mrb[0].mxu0
        %385 = vmatprep.mubr.f32.mxu0 0.0
        %386 = vmatmul.mubr.f32.gmra.mrb[0].mxu0 %v300
        %v387 = vpop.f32.mrb[0].mxu0
        %v388 = vadd.f32 0.0, %v387
        %v389 = vpop.f32.mrb[0].mxu0
        %390 = vdwg.mxu0
        %v391 = vxor.u32 %v373, 2147483648
        %v392 = vxor.u32 %v378, 2147483648
        %v393 = vxor.u32 %v383, 2147483648
        %v394 = vxor.u32 %v388, 2147483648
        %v395 = vmul.f32 %v391, 1.442695
        %v396 = vpow.pop %v395
        %v397 = vmul.f32 %v392, 1.442695
        %v398 = vpow.pop %v397
        %v399 = vmul.f32 %v393, 1.442695
        %v400 = vpow.pop %v399
        %v401 = vmul.f32 %v394, 1.442695
        %v402 = vpow.pop %v401
        %v403 = vadd.f32 %v396, 1.0
        %v404 = vadd.f32 %v398, 1.0
        %v405 = vadd.f32 %v400, 1.0
        %v406 = vadd.f32 %v402, 1.0
        %v407 = vrcp.pop %v403
        %v408 = vmul.f32 1.0, %v407
        %v409 = vrcp.pop %v404
        %v410 = vmul.f32 1.0, %v409
        %v411 = vrcp.pop %v405
        %v412 = vmul.f32 1.0, %v411
        %v413 = vrcp.pop %v406
        %v414 = vmul.f32 1.0, %v413
        %416 = vset.pattern.permute.xlu0 0
        %417 = vperm.xlu0 %416, %v408
        %v418 = vpop.permute.xlu0 %417
        %421 = vset.pattern.permute.xlu0 0
        %422 = vperm.xlu0 %421, %v410
        %v423 = vpop.permute.xlu0 %422
        %426 = vset.pattern.permute.xlu0 0
        %427 = vperm.xlu0 %426, %v412
        %v428 = vpop.permute.xlu0 %427
        %431 = vset.pattern.permute.xlu0 0
        %432 = vperm.xlu0 %431, %v414
        %v433 = vpop.permute.xlu0 %432
        %v435 = vmul.f32 %v189, %v418
        %v436 = vmul.f32 %v190, %v418
        %v437 = vmul.f32 %v191, %v423
        %v438 = vmul.f32 %v192, %v423
        %v439 = vmul.f32 %v193, %v428
        %v440 = vmul.f32 %v194, %v428
        %v441 = vmul.f32 %v195, %v433
        %v442 = vmul.f32 %v196, %v433
        %443 = vst [vmem:[%s188] sm:$0xff] %v435
        %444 = vst [vmem:[%s188 + $0x8] sm:$0xff] %v436
        %445 = vst [vmem:[%s188 + $0x10] sm:$0xff] %v437
        %446 = vst [vmem:[%s188 + $0x18] sm:$0xff] %v438
        %447 = vst [vmem:[%s188 + $0x20] sm:$0xff] %v439
        %448 = vst [vmem:[%s188 + $0x28] sm:$0xff] %v440
        %449 = vst [vmem:[%s188 + $0x30] sm:$0xff] %v441
        %450 = vst [vmem:[%s188 + $0x38] sm:$0xff] %v442
        %s451 = sand.u32 %s96, 1
        %s452 = scalar_lea.sflag [#allocation4], %s451
        %s453 = sand.u32 %s96, 1
        %s454 = smul.addr %s453, 64
        %s455 = scalar_lea.vmem [#allocation5], %s454
        // Predicated region
        $region37: #{tpu_custom_call.1} parent=31 // pred_check
          %p456 = pneg %p106
        $region38: #{tpu_custom_call.1} parent=31 // pred_check_branch
          %458 = sbr.rel (%p456) target = $region40
        $region39: #{tpu_custom_call.1} parent=31 // pred_region
          %s460 = ssub.s32 1024, 1024
          %461 = vsyncadd %s452, %s460
          %s462 = smul.addr %s20, 8
          %s463 = smul.addr %s462, 128
          %s464 = scalar_lea.hbm %s3, %s463
          %s465 = sshll.u32 %s455, 4
          %s466 = int_to_ptr.vmem [resolvable:$true] %s465
          %471 = dma.vmem_to_hbm [thread:$0]  %s466, 1024, %s464, %s452, 256, 256, 16
        $region40: #{tpu_custom_call.1} parent=31 // pred_fallthru
          _
      $region32: #{tpu_custom_call.1} parent=5 // pred_fallthru
        _
      %p472 = scmp.le.s32.totalorder 2, %s15
      // Predicated region
      $region41: #{tpu_custom_call.1} parent=5 // pred_check
        %p473 = pneg %p472
      $region42: #{tpu_custom_call.1} parent=5 // pred_check_branch
        %475 = sbr.rel (%p473) target = $region44
      $region43: #{tpu_custom_call.1} parent=5 // pred_region
        %s476 = ssub.s32 %s15, 2
        // Predicated region
        $region45: #{tpu_custom_call.1} parent=43 // pred_check
          %p477 = pneg %p112
        $region46: #{tpu_custom_call.1} parent=43 // pred_check_branch
          %479 = sbr.rel (%p477) target = $region48
        $region47: #{tpu_custom_call.1} parent=43 // pred_region
          %s480 = sand.u32 %s97, 1
          %s481 = scalar_lea.sflag [#allocation4], %s480
          %s482 = sand.u32 %s97, 1
          %s483 = smul.addr %s482, 64
          %s484 = scalar_lea.vmem [#allocation5], %s483
          %485 = dma.done %s481, 1024
        $region48: #{tpu_custom_call.1} parent=43 // pred_fallthru
          _
      $region44: #{tpu_custom_call.1} parent=5 // pred_fallthru
        _
    $region6: #{tpu_custom_call.1} parent=1 // loop_footer
      %s19 = sadd.s32 1, %s15
    $region7: #{tpu_custom_call.1} parent=1 // loop_footer_branch
      %14 = sbr.rel target = $region3
    $region8: #{tpu_custom_call.1} parent=1 // loop_exit
      _
    %486 = vsyncpa [#allocation3], 1
    %s487 = scalar_lea.sflag [#allocation3], 1
    %488 = vsyncpa %s487, 1
    %489 = vsyncpa [#allocation4], 1
    %s490 = scalar_lea.sflag [#allocation4], 1
    %491 = vsyncpa %s490, 1

</llo_original>
